<compile_context>
chip_gen: v5e
topology: v5e:2x2
jax: 0.10.0
libtpu: 0.0.40
codegen_flags: <defaults>
</compile_context>

<pallas_src>
import math

import jax
import jax.numpy as jnp
from jax.experimental import pallas as pl
from jax.experimental.pallas import tpu as pltpu


def _copy_kernel(x_ref, o_ref):
    # Lane-dense block copy: no reshape, no relayout, full-width vector stores.
    o_ref[...] = x_ref[...]


def _round_down(x: int, unit: int) -> int:
    return (x // unit) * unit


def _round_up(x: int, unit: int) -> int:
    return ((x + unit - 1) // unit) * unit


def _vmem_budgets():
    """(tile_byte_budget, vmem_limit_bytes) — generation-aware, safe fallback."""
    vmem = None
    try:
        vmem = pltpu.get_tpu_info().vmem_capacity_bytes
    except Exception:
        vmem = None
    if vmem is not None and vmem >= 96 * 1024 * 1024:
        # v5e / v6e: 128 MiB physical VMEM.  Large tiles amortize the ~0.35 us
        # per-grid-step overhead; 4 x 8 MiB double-buffered = 32 MiB <= 64 MiB.
        return 8 * 1024 * 1024, 64 * 1024 * 1024
    # v7x (64 MiB physical, 32 MiB scoped default) or unknown chip:
    # 4 MiB tiles -> 16 MiB total buffering, well under the ceiling.
    return 4 * 1024 * 1024, 32 * 1024 * 1024


def _choose_tiles(b: int, flat: int, itemsize: int, tile_budget: int):
    """Pick (tb, tf): lane-dense, budget-capped, ragged-last-block friendly."""
    # Sublane packing unit: 8 for 32-bit, 16 for bf16/f16, 32 for int8/fp8.
    sub = max(8, 32 // max(1, itemsize))
    total = b * flat * itemsize

    # Truly small input: one full-extent block (exempt from (8,128) rule).
    if total < min(tile_budget, 512 * 1024):
        return b, flat

    # Flat (lane) tile: largest multiple of 128 within the budget, assuming at
    # least `sub` rows.  Never falls back to an arbitrary full flat dim.
    if flat <= 128:
        tf = flat
    else:
        budget_elems = max(128, tile_budget // max(1, sub * itemsize))
        tf = max(128, min(_round_down(flat, 128), _round_down(budget_elems, 128)))

    # Batch (sublane) tile: multiple of the sublane unit, fills what remains of
    # the budget.  Ragged last block via pl.cdiv when b isn't a multiple.
    if b <= sub:
        tb = b
    else:
        rows_budget = max(sub, tile_budget // max(1, tf * itemsize))
        tb = max(sub, min(_round_down(b, sub), _round_down(rows_budget, sub)))

    # v7x has 2 TensorCores: guarantee >= 2 blocks on a parallel axis for
    # inputs big enough (>= 512 KiB) to hide per-step launch overhead.
    if pl.cdiv(b, tb) * pl.cdiv(flat, tf) == 1:
        if flat >= 256:
            tf = max(128, _round_up(pl.cdiv(flat, 2), 128))
        elif b >= 2 * sub:
            tb = max(sub, _round_up(pl.cdiv(b, 2), sub))
    return tb, tf


def flatten(x: jax.Array) -> jax.Array:
    """Equivalent of torch: input_tensor.view(input_tensor.size(0), -1)."""
    b = x.shape[0]
    flat = math.prod(x.shape[1:]) if x.ndim > 1 else 1

    # Row-major flatten of a contiguous array: metadata-only in XLA.
    x2 = jnp.reshape(x, (b, flat))

    # Degenerate shapes: nothing worth launching a kernel for.
    if b == 0 or flat == 0 or x.ndim <= 1:
        return x2

    itemsize = jnp.dtype(x.dtype).itemsize
    tile_budget, vmem_limit = _vmem_budgets()
    tb, tf = _choose_tiles(b, flat, itemsize, tile_budget)
    grid = (pl.cdiv(b, tb), pl.cdiv(flat, tf))

    return pl.pallas_call(
        _copy_kernel,
        out_shape=jax.ShapeDtypeStruct((b, flat), x.dtype),
        grid_spec=pltpu.PrefetchScalarGridSpec(
            num_scalar_prefetch=0,
            grid=grid,
            in_specs=[pl.BlockSpec((tb, tf), lambda i, j: (i, j))],
            out_specs=pl.BlockSpec((tb, tf), lambda i, j: (i, j)),
        ),
        compiler_params=pltpu.CompilerParams(
            dimension_semantics=("parallel", "parallel"),
            vmem_limit_bytes=vmem_limit,
        ),
    )(x2)


if __name__ == "__main__":
    key = jax.random.PRNGKey(0)
    # Small NCHW input consistent with a conv feature map: B=2, C=4, H=W=16.
    x = jax.random.normal(key, (2, 4, 16, 16), dtype=jnp.float32)

    y = jax.block_until_ready(flatten(x))

    # Reference: plain JAX reshape (== torch .view(B, -1) for contiguous NCHW).
    y_ref = x.reshape(x.shape[0], -1)
    assert y.shape == (2, 4 * 16 * 16), y.shape
    assert y.dtype == x.dtype
    assert jnp.array_equal(y, y_ref), "mismatch vs reference flatten"

    # Second check: exercises the tiled path (batch not a multiple of the
    # sublane unit -> ragged last block, and a multi-block parallel grid).
    x2 = jax.random.normal(jax.random.PRNGKey(1), (20, 8, 64, 64), dtype=jnp.float32)
    y2 = jax.block_until_ready(flatten(x2))
    assert y2.shape == (20, 8 * 64 * 64)
    assert jnp.array_equal(y2, x2.reshape(20, -1)), "mismatch on tiled path"

    print("KERNEL_OK")
</pallas_src>

<mosaic_0001>
module attributes {stable_mosaic.version = 11 : i64} {
  func.func @_copy_kernel(%arg0: i32, %arg1: i32, %arg2: memref<2x1024xf32, #tpu.memory_space<vmem>>, %arg3: memref<2x1024xf32, #tpu.memory_space<vmem>>) attributes {dimension_semantics = [#tpu.dimension_semantics<parallel>, #tpu.dimension_semantics<parallel>], iteration_bounds = array<i64: 1, 1>, scalar_prefetch = 0 : i64, scratch_operands = 0 : i64, tpu.core_type = #tpu.core_type<tc>, window_params = [{transform_indices = @transform_0, window_bounds = array<i64: 2, 1024>}, {transform_indices = @transform_1, window_bounds = array<i64: 2, 1024>}]} {
    %c0 = arith.constant 0 : index
    %c0_0 = arith.constant 0 : index
    %0 = vector.load %arg2[%c0, %c0_0] : memref<2x1024xf32, #tpu.memory_space<vmem>>, vector<2x1024xf32>
    %c0_1 = arith.constant 0 : index
    %c0_2 = arith.constant 0 : index
    %1 = vector.load %arg3[%c0_1, %c0_2] : memref<2x1024xf32, #tpu.memory_space<vmem>>, vector<2x1024xf32>
    tpu.vector_store %arg3[%c0_1, %c0_2], %0 {strides = array<i32>} : memref<2x1024xf32, #tpu.memory_space<vmem>>, vector<2x1024xf32>,
    return
  }
  func.func @transform_0(%arg0: i32, %arg1: i32) -> (i32, i32) {
    %c0_i32 = arith.constant 0 : i32
    return %arg0, %arg1 : i32, i32
  }
  func.func @transform_1(%arg0: i32, %arg1: i32) -> (i32, i32) {
    %c0_i32 = arith.constant 0 : i32
    return %arg0, %arg1 : i32, i32
  }
}

</mosaic_0001>

<llo_original>
// kernel: tpu_custom_call.1
$region0: #{tpu_custom_call.1}
  #allocation0 [shape = 'u32[]', space=smem, size = 0x4, offset = 0x4, fixed_abs, tag = 'smem constant byte address 0x4 - core index']
  #allocation1 [shape = 'u32[72,128]{1,0:T(1,128)}', space=vmem, size = 0x9000, scoped, tag = 'internal scratch']
  %s0 = inlined_call_operand.hbm [shape: f32[2,1024], index: 0, kind: input, shape index: {}]
  %s1 = inlined_call_operand.hbm [shape: f32[2,1024], index: 1, kind: output, shape index: {}]
  %s2 = sld [smem:[#allocation0]]
  $region18: #{tpu_custom_call.1} parent=0
    _
  %s4 = ssub.s32 1, %s2
  %s5 = scalar_select 0, %s4, %s2
  $region1: #{tpu_custom_call.1} parent=0
    #allocation2 [shape = 'u8[8192]{0}', space=vmem, size = 0x2000, scoped, tag = 'input window, operand 0, single buffered']
    #allocation3 [shape = 's32[1]{0}', space=sflag, size = 0x4, scoped, tag = 'scoped memory for tpu_custom_call.1']
    #allocation4 [shape = 's32[1]{0}', space=sflag, size = 0x4, scoped, tag = 'scoped memory for tpu_custom_call.1']
    #allocation5 [shape = 'u8[8192]{0}', space=vmem, size = 0x2000, scoped, tag = 'output window, operand 0, single buffered']
    %6 = vsyncpa [#allocation3], 0
    %7 = vsyncpa [#allocation4], 0
    // Predicated region
    $region2: #{tpu_custom_call.1} parent=1 // pred_check
      _
    $region3: #{tpu_custom_call.1} parent=1 // pred_check_branch
      %9 = sbr.rel (0) target = $region5
    $region4: #{tpu_custom_call.1} parent=1 // pred_region
      %11 = vsyncadd [#allocation3], 0
      %s13 = sshll.u32 %s0, 4
      %s14 = int_to_ptr.hbm [resolvable:$true] %s13
      %s15 = sshll.u32 [#allocation2], 4
      %s16 = int_to_ptr.vmem [resolvable:$true] %s15
      %18 = dma.hbm_to_vmem [thread:$0]  %s14, 256, %s16, [#allocation3]
    $region5: #{tpu_custom_call.1} parent=1 // pred_fallthru
      _
    // Predicated region
    $region6: #{tpu_custom_call.1} parent=1 // pred_check
      _
    $region7: #{tpu_custom_call.1} parent=1 // pred_check_branch
      %20 = sbr.rel (0) target = $region9
    $region8: #{tpu_custom_call.1} parent=1 // pred_region
      %22 = dma.done [#allocation3], 256
    $region9: #{tpu_custom_call.1} parent=1 // pred_fallthru
      _
    %v23 = vld [vmem:[#allocation2] sm:$0xff]
    %v24 = vld [vmem:[#allocation2 + $0x8] sm:$0xff]
    %25 = vst [vmem:[#allocation5] sm:$0xff] %v23
    %26 = vst [vmem:[#allocation5 + $0x8] sm:$0xff] %v24
    // Predicated region
    $region10: #{tpu_custom_call.1} parent=1 // pred_check
      _
    $region11: #{tpu_custom_call.1} parent=1 // pred_check_branch
      %28 = sbr.rel (0) target = $region13
    $region12: #{tpu_custom_call.1} parent=1 // pred_region
      %30 = vsyncadd [#allocation4], 0
      %s32 = sshll.u32 [#allocation5], 4
      %s33 = int_to_ptr.vmem [resolvable:$true] %s32
      %s34 = sshll.u32 %s1, 4
      %s35 = int_to_ptr.hbm [resolvable:$true] %s34
      %37 = dma.vmem_to_hbm [thread:$0]  %s33, 256, %s35, [#allocation4]
    $region13: #{tpu_custom_call.1} parent=1 // pred_fallthru
      _
    // Predicated region
    $region14: #{tpu_custom_call.1} parent=1 // pred_check
      _
    $region15: #{tpu_custom_call.1} parent=1 // pred_check_branch
      %39 = sbr.rel (0) target = $region17
    $region16: #{tpu_custom_call.1} parent=1 // pred_region
      %41 = dma.done [#allocation4], 256
    $region17: #{tpu_custom_call.1} parent=1 // pred_fallthru
      _
    %42 = vsyncpa [#allocation3], 1
    %43 = vsyncpa [#allocation4], 1

</llo_original>
